<compile_context>
chip_gen: v6e
topology: v6e:2x2x1
jax: 0.10.0
libtpu: 0.0.40
codegen_flags: <defaults>
</compile_context>

<pallas_src>
import math

import jax
import jax.numpy as jnp
from jax.experimental import pallas as pl
from jax.experimental.pallas import tpu as pltpu

_LOG_SQRT_2PI = 0.5 * math.log(2.0 * math.pi)


def _round_up(n: int, m: int) -> int:
    return ((n + m - 1) // m) * m


def make_policy_kernel(action_bound: float, hidden_dim: int,
                       s_pad: int, a_pad: int, bias_head_off: int):
    H, SP, AP, HOFF = hidden_dim, s_pad, a_pad, bias_head_off

    def kernel(xin_ref, w1_ref, whd_ref, bias_ref, out_ref):
        # packed stream [x_pad | eps_pad]; both slices 128-lane aligned -> free views
        x = xin_ref[:, :SP]
        eps = xin_ref[:, SP:]

        # packed biases: [b1 | pad | bmu | pad | bstd | pad]
        b1 = bias_ref[:, :H]            # (1, H)
        bhd = bias_ref[:, HOFF:]        # (1, 2*AP), 128-aligned offset

        # fc1 + ReLU  (zero-padded rows of w1 contribute exact zeros)
        h = jnp.dot(x, w1_ref[...], preferred_element_type=jnp.float32) + b1
        h = jnp.maximum(h, 0.0)

        # fused mu/std heads: one MXU push, each head padded to a 128-lane slab
        heads = jnp.dot(h, whd_ref[...], preferred_element_type=jnp.float32) + bhd
        mu = heads[:, :AP]
        pre = heads[:, AP:]

        # softplus, numerically stable form (matches F.softplus)
        std = jnp.maximum(pre, 0.0) + jnp.log1p(jnp.exp(-jnp.abs(pre)))

        # reparameterized sample: mu + std * eps;  (sample - mu)/std == eps
        # exactly, so reuse eps and skip the divide.
        sample = mu + std * eps
        log_prob = -0.5 * (eps * eps) - jnp.log(std) - _LOG_SQRT_2PI

        # tanh squash; reference applies tanh AGAIN inside the correction term
        action = jnp.tanh(sample)
        log_prob = log_prob - jnp.log(1.0 - jnp.tanh(action) ** 2 + 1e-07)

        # two 128-aligned, lane-dense stores (no in-kernel concatenate)
        out_ref[:, :AP] = action * action_bound
        out_ref[:, AP:] = log_prob

    return kernel


def policy_net_continuous(x, params, eps, action_bound):
    """Forward pass of PolicyNetContinuous as a single Pallas TPU kernel.

    x:   [B, state_dim] float32
    eps: [B, action_dim] float32 standard-normal noise (reparameterization)
    params: (w1 [S,H], b1 [1,H], wmu [H,A], bmu [1,A], wstd [H,A], bstd [1,A])
            weights stored pre-transposed as [in, out]
    returns: (action [B, A], log_prob [B, A])
    """
    w1, b1, wmu, bmu, wstd, bstd = params
    B, S = x.shape
    H = w1.shape[1]
    A = wmu.shape[1]

    SP = _round_up(S, 128)      # padded state width (lane-aligned x slice)
    AP = _round_up(A, 128)      # padded per-head width (lane-dense heads/output)
    HOFF = _round_up(H, 128)    # 128-aligned start of the [bmu|bstd] bias segment

    # Host-side packing / zero padding to 128-lane segments (cheap XLA ops,
    # fused & constant-folded under jit):
    x_pack = jnp.concatenate(
        [jnp.pad(x, ((0, 0), (0, SP - S))),
         jnp.pad(eps, ((0, 0), (0, AP - A)))], axis=1)               # [B, SP+AP]
    w1_p = jnp.pad(w1, ((0, SP - S), (0, 0)))                        # [SP, H]
    w_heads = jnp.concatenate(
        [jnp.pad(wmu, ((0, 0), (0, AP - A))),
         jnp.pad(wstd, ((0, 0), (0, AP - A)))], axis=1)              # [H, 2*AP]
    bias_packed = jnp.concatenate(
        [jnp.pad(b1, ((0, 0), (0, HOFF - H))),
         jnp.pad(bmu, ((0, 0), (0, AP - A))),
         jnp.pad(bstd, ((0, 0), (0, AP - A)))], axis=1)              # [1, HOFF+2*AP]

    # Batch tiling: big tiles amortize the ~0.35 us/step pipeline overhead; for
    # large batches keep >= 2 tiles (multiple-of-8 rows) so the "parallel" batch
    # axis can be sharded across v7x's two TensorCores.
    if B <= 256:
        TB = B
    else:
        TB = min(512, _round_up(pl.cdiv(B, 2), 8))
    grid = (pl.cdiv(B, TB),)

    kernel = make_policy_kernel(float(action_bound), H, SP, AP, HOFF)
    out = pl.pallas_call(
        kernel,
        out_shape=jax.ShapeDtypeStruct((B, 2 * AP), jnp.float32),
        grid=grid,
        in_specs=[
            pl.BlockSpec((TB, SP + AP), lambda i: (i, 0)),        # [x|eps] streamed
            pl.BlockSpec((SP, H), lambda i: (0, 0)),              # w1 (resident)
            pl.BlockSpec((H, 2 * AP), lambda i: (0, 0)),          # [wmu|wstd] (resident)
            pl.BlockSpec((1, HOFF + 2 * AP), lambda i: (0, 0)),   # packed biases (resident)
        ],
        out_specs=pl.BlockSpec((TB, 2 * AP), lambda i: (i, 0)),
        compiler_params=pltpu.CompilerParams(
            dimension_semantics=("parallel",),      # batch tiles independent
            vmem_limit_bytes=32 * 1024 * 1024,      # explicit; safe on v5e/v6e/v7x
        ),
    )(x_pack, w1_p, w_heads, bias_packed)

    action = out[:, :A]
    log_prob = out[:, AP:AP + A]
    return action, log_prob


def init_params(key, state_dim, hidden_dim, action_dim):
    """Deterministic PyTorch-Linear-style init (uniform +-1/sqrt(fan_in)).
    Weights stored pre-transposed as [in, out]."""
    ks = jax.random.split(key, 6)

    def lin(kw, kb, fan_in, fan_out):
        bound = 1.0 / math.sqrt(fan_in)
        w = jax.random.uniform(kw, (fan_in, fan_out), jnp.float32, -bound, bound)
        b = jax.random.uniform(kb, (1, fan_out), jnp.float32, -bound, bound)
        return w, b

    w1, b1 = lin(ks[0], ks[1], state_dim, hidden_dim)
    wmu, bmu = lin(ks[2], ks[3], hidden_dim, action_dim)
    wstd, bstd = lin(ks[4], ks[5], hidden_dim, action_dim)
    return (w1, b1, wmu, bmu, wstd, bstd)


if __name__ == "__main__":
    state_dim, hidden_dim, action_dim = 16, 32, 4
    action_bound = 2.0
    batch = 8

    key = jax.random.PRNGKey(0)
    k_param, k_x, k_eps = jax.random.split(key, 3)

    params = init_params(k_param, state_dim, hidden_dim, action_dim)
    x = jax.random.normal(k_x, (batch, state_dim), jnp.float32)
    eps = jax.random.normal(k_eps, (batch, action_dim), jnp.float32)

    # TODO(synk): eps (dist.rsample()'s noise) is generated host-side; there is no
    # in-kernel Normal sampler matching torch's RNG stream.
    fwd = jax.jit(lambda x_, p_, e_: policy_net_continuous(x_, p_, e_, action_bound))
    action, log_prob = fwd(x, params, eps)
    jax.block_until_ready((action, log_prob))

    # pure-JAX reference check (mirrors the PyTorch module, incl. double-tanh)
    w1, b1, wmu, bmu, wstd, bstd = params
    h = jnp.maximum(x @ w1 + b1, 0.0)
    mu = h @ wmu + bmu
    std = jax.nn.softplus(h @ wstd + bstd)
    sample = mu + std * eps
    lp = -0.5 * ((sample - mu) / std) ** 2 - jnp.log(std) - 0.5 * jnp.log(2 * jnp.pi)
    act = jnp.tanh(sample)
    lp = lp - jnp.log(1.0 - jnp.tanh(act) ** 2 + 1e-07)
    act = act * action_bound

    assert action.shape == (batch, action_dim) and log_prob.shape == (batch, action_dim)
    assert jnp.allclose(action, act, atol=1e-5), "action mismatch"
    assert jnp.allclose(log_prob, lp, atol=1e-5), "log_prob mismatch"

    print("KERNEL_OK")
</pallas_src>

<mosaic_0001>
module attributes {stable_mosaic.version = 11 : i64} {
  func.func @kernel(%arg0: i32, %arg1: memref<8x256xf32, #tpu.memory_space<vmem>>, %arg2: memref<128x32xf32, #tpu.memory_space<vmem>>, %arg3: memref<32x256xf32, #tpu.memory_space<vmem>>, %arg4: memref<1x384xf32, #tpu.memory_space<vmem>>, %arg5: memref<8x256xf32, #tpu.memory_space<vmem>>) attributes {dimension_semantics = [#tpu.dimension_semantics<parallel>], iteration_bounds = array<i64: 1>, scalar_prefetch = 0 : i64, scratch_operands = 0 : i64, tpu.core_type = #tpu.core_type<tc>, window_params = [{transform_indices = @transform_0, window_bounds = array<i64: 8, 256>}, {pipeline_mode = #tpu.pipeline_mode<synchronous>, transform_indices = @transform_1, window_bounds = array<i64: 128, 32>}, {pipeline_mode = #tpu.pipeline_mode<synchronous>, transform_indices = @transform_2, window_bounds = array<i64: 32, 256>}, {pipeline_mode = #tpu.pipeline_mode<synchronous>, transform_indices = @transform_3, window_bounds = array<i64: 1, 384>}, {transform_indices = @transform_4, window_bounds = array<i64: 8, 256>}]} {
    %c0 = arith.constant 0 : index
    %c0_0 = arith.constant 0 : index
    %0 = vector.load %arg1[%c0, %c0_0] : memref<8x256xf32, #tpu.memory_space<vmem>>, vector<8x128xf32>
    %c0_1 = arith.constant 0 : index
    %c128 = arith.constant 128 : index
    %1 = vector.load %arg1[%c0_1, %c128] : memref<8x256xf32, #tpu.memory_space<vmem>>, vector<8x128xf32>
    %c0_2 = arith.constant 0 : index
    %c0_3 = arith.constant 0 : index
    %2 = vector.load %arg4[%c0_2, %c0_3] : memref<1x384xf32, #tpu.memory_space<vmem>>, vector<1x32xf32>
    %c0_4 = arith.constant 0 : index
    %c128_5 = arith.constant 128 : index
    %3 = vector.load %arg4[%c0_4, %c128_5] : memref<1x384xf32, #tpu.memory_space<vmem>>, vector<1x256xf32>
    %c0_6 = arith.constant 0 : index
    %c0_7 = arith.constant 0 : index
    %4 = vector.load %arg2[%c0_6, %c0_7] : memref<128x32xf32, #tpu.memory_space<vmem>>, vector<128x32xf32>
    %cst = arith.constant dense<0.000000e+00> : vector<8x32xf32>
    %5 = tpu.matmul %0, %4, %cst {dimension_numbers = #tpu.dot_dimension_numbers<[1], [0], [0], [1], [0, 0, 1, 1], [], []>} : vector<8x128xf32>, vector<128x32xf32>, vector<8x32xf32> -> vector<8x32xf32>
    %6 = vector.broadcast %2 : vector<1x32xf32> to vector<8x32xf32>
    %7 = arith.addf %5, %6 : vector<8x32xf32>
    %cst_8 = arith.constant 0.000000e+00 : f32
    %8 = vector.broadcast %cst_8 : f32 to vector<8x32xf32>
    %9 = arith.maximumf %7, %8 : vector<8x32xf32>
    %c0_9 = arith.constant 0 : index
    %c0_10 = arith.constant 0 : index
    %10 = vector.load %arg3[%c0_9, %c0_10] : memref<32x256xf32, #tpu.memory_space<vmem>>, vector<32x256xf32>
    %cst_11 = arith.constant dense<0.000000e+00> : vector<8x256xf32>
    %11 = tpu.matmul %9, %10, %cst_11 {dimension_numbers = #tpu.dot_dimension_numbers<[1], [0], [0], [1], [0, 0, 1, 1], [], []>} : vector<8x32xf32>, vector<32x256xf32>, vector<8x256xf32> -> vector<8x256xf32>
    %12 = vector.broadcast %3 : vector<1x256xf32> to vector<8x256xf32>
    %13 = arith.addf %11, %12 : vector<8x256xf32>
    %14 = vector.extract_strided_slice %13 {offsets = [0, 0], sizes = [8, 128], strides = [1, 1]} : vector<8x256xf32> to vector<8x128xf32>
    %15 = vector.extract_strided_slice %13 {offsets = [0, 128], sizes = [8, 128], strides = [1, 1]} : vector<8x256xf32> to vector<8x128xf32>
    %cst_12 = arith.constant 0.000000e+00 : f32
    %16 = vector.broadcast %cst_12 : f32 to vector<8x128xf32>
    %17 = arith.maximumf %15, %16 : vector<8x128xf32>
    %18 = math.absf %15 : vector<8x128xf32>
    %cst_13 = arith.constant 0.000000e+00 : f32
    %19 = vector.broadcast %cst_13 : f32 to vector<8x128xf32>
    %20 = arith.subf %19, %18 : vector<8x128xf32>
    %21 = math.exp %20 : vector<8x128xf32>
    %22 = math.log1p %21 : vector<8x128xf32>
    %23 = arith.addf %17, %22 : vector<8x128xf32>
    %24 = arith.mulf %23, %1 : vector<8x128xf32>
    %25 = arith.addf %14, %24 : vector<8x128xf32>
    %26 = arith.mulf %1, %1 : vector<8x128xf32>
    %cst_14 = arith.constant -5.000000e-01 : f32
    %27 = vector.broadcast %cst_14 : f32 to vector<8x128xf32>
    %28 = arith.mulf %27, %26 : vector<8x128xf32>
    %29 = math.log %23 : vector<8x128xf32>
    %30 = arith.subf %28, %29 : vector<8x128xf32>
    %cst_15 = arith.constant 0.918938517 : f32
    %31 = vector.broadcast %cst_15 : f32 to vector<8x128xf32>
    %32 = arith.subf %30, %31 : vector<8x128xf32>
    %33 = math.tanh %25 : vector<8x128xf32>
    %34 = math.tanh %33 : vector<8x128xf32>
    %35 = arith.mulf %34, %34 : vector<8x128xf32>
    %cst_16 = arith.constant 1.000000e+00 : f32
    %36 = vector.broadcast %cst_16 : f32 to vector<8x128xf32>
    %37 = arith.subf %36, %35 : vector<8x128xf32>
    %cst_17 = arith.constant 1.000000e-07 : f32
    %38 = vector.broadcast %cst_17 : f32 to vector<8x128xf32>
    %39 = arith.addf %37, %38 : vector<8x128xf32>
    %40 = math.log %39 : vector<8x128xf32>
    %41 = arith.subf %32, %40 : vector<8x128xf32>
    %cst_18 = arith.constant 2.000000e+00 : f32
    %42 = vector.broadcast %cst_18 : f32 to vector<8x128xf32>
    %43 = arith.mulf %33, %42 : vector<8x128xf32>
    %c0_19 = arith.constant 0 : index
    %c0_20 = arith.constant 0 : index
    %44 = vector.load %arg5[%c0_19, %c0_20] : memref<8x256xf32, #tpu.memory_space<vmem>>, vector<8x128xf32>
    tpu.vector_store %arg5[%c0_19, %c0_20], %43 {strides = array<i32>} : memref<8x256xf32, #tpu.memory_space<vmem>>, vector<8x128xf32>,
    %c0_21 = arith.constant 0 : index
    %c128_22 = arith.constant 128 : index
    %45 = vector.load %arg5[%c0_21, %c128_22] : memref<8x256xf32, #tpu.memory_space<vmem>>, vector<8x128xf32>
    tpu.vector_store %arg5[%c0_21, %c128_22], %41 {strides = array<i32>} : memref<8x256xf32, #tpu.memory_space<vmem>>, vector<8x128xf32>,
    return
  }
  func.func @transform_0(%arg0: i32) -> (i32, i32) {
    %c0_i32 = arith.constant 0 : i32
    %c0_i32_0 = arith.constant 0 : i32
    return %arg0, %c0_i32 : i32, i32
  }
  func.func @transform_1(%arg0: i32) -> (i32, i32) {
    %c0_i32 = arith.constant 0 : i32
    %c0_i32_0 = arith.constant 0 : i32
    %c0_i32_1 = arith.constant 0 : i32
    return %c0_i32, %c0_i32_0 : i32, i32
  }
  func.func @transform_2(%arg0: i32) -> (i32, i32) {
    %c0_i32 = arith.constant 0 : i32
    %c0_i32_0 = arith.constant 0 : i32
    %c0_i32_1 = arith.constant 0 : i32
    return %c0_i32, %c0_i32_0 : i32, i32
  }
  func.func @transform_3(%arg0: i32) -> (i32, i32) {
    %c0_i32 = arith.constant 0 : i32
    %c0_i32_0 = arith.constant 0 : i32
    %c0_i32_1 = arith.constant 0 : i32
    return %c0_i32, %c0_i32_0 : i32, i32
  }
  func.func @transform_4(%arg0: i32) -> (i32, i32) {
    %c0_i32 = arith.constant 0 : i32
    %c0_i32_0 = arith.constant 0 : i32
    return %arg0, %c0_i32 : i32, i32
  }
}

</mosaic_0001>

<llo_original>
// kernel: _lambda_.1
$region0: #{_lambda_.1}
  #allocation0 [shape = 'u32[]', space=smem, size = 0x4, offset = 0x4, fixed_abs, tag = 'smem constant byte address 0x4 - core index']
  #allocation1 [shape = 'u32[144,128]{1,0:T(1,128)}', space=vmem, size = 0x12000, scoped, tag = 'internal scratch']
  %s0 = inlined_call_operand.vmem [shape: f32[8,256], index: 0, kind: input, shape index: {}]
  %s1 = inlined_call_operand.vmem [shape: f32[128,32], index: 1, kind: input, shape index: {}]
  %s2 = inlined_call_operand.vmem [shape: f32[32,256], index: 2, kind: input, shape index: {}]
  %s3 = inlined_call_operand.vmem [shape: f32[1,384], index: 3, kind: input, shape index: {}]
  %s4 = inlined_call_operand.vmem [shape: f32[8,256], index: 4, kind: output, shape index: {}]
  %s5 = sld [smem:[#allocation0]]
  $region26: #{_lambda_.1} parent=0
    _
  %s7 = ssub.s32 1, %s5
  %s8 = scalar_select 0, %s7, %s5
  // Predicated region
  $region2: #{_lambda_.1} parent=0 // pred_check
    _
  $region3: #{_lambda_.1} parent=0 // pred_check_branch
    %10 = sbr.rel (0) target = $region5
  $region4: #{_lambda_.1} parent=0 // pred_region
    _
  $region5: #{_lambda_.1} parent=0 // pred_fallthru
    _
  // Predicated region
  $region6: #{_lambda_.1} parent=0 // pred_check
    _
  $region7: #{_lambda_.1} parent=0 // pred_check_branch
    %12 = sbr.rel (0) target = $region9
  $region8: #{_lambda_.1} parent=0 // pred_region
    _
  $region9: #{_lambda_.1} parent=0 // pred_fallthru
    _
  // Predicated region
  $region10: #{_lambda_.1} parent=0 // pred_check
    _
  $region11: #{_lambda_.1} parent=0 // pred_check_branch
    %14 = sbr.rel (0) target = $region13
  $region12: #{_lambda_.1} parent=0 // pred_region
    _
  $region13: #{_lambda_.1} parent=0 // pred_fallthru
    _
  // Predicated region
  $region14: #{_lambda_.1} parent=0 // pred_check
    _
  $region15: #{_lambda_.1} parent=0 // pred_check_branch
    %16 = sbr.rel (0) target = $region17
  $region16: #{_lambda_.1} parent=0 // pred_region
    _
  $region17: #{_lambda_.1} parent=0 // pred_fallthru
    _
  %v17 = vld [vmem:[%s0] sm:$0xff]
  %v18 = vld [vmem:[%s0 + $0x8] sm:$0xff]
  %v19 = vld [vmem:[%s3] sm:$0x1]
  %v20 = vld [vmem:[%s3 + $0x1] sm:$0x3]
  %v21 = vld [vmem:[%s1] sm:$0xff]
  %v22 = vld [vmem:[%s1 + $0x8] sm:$0xff]
  %v23 = vld [vmem:[%s1 + $0x10] sm:$0xff]
  %v24 = vld [vmem:[%s1 + $0x18] sm:$0xff]
  %v25 = vld [vmem:[%s1 + $0x20] sm:$0xff]
  %v26 = vld [vmem:[%s1 + $0x28] sm:$0xff]
  %v27 = vld [vmem:[%s1 + $0x30] sm:$0xff]
  %v28 = vld [vmem:[%s1 + $0x38] sm:$0xff]
  %v29 = vld [vmem:[%s1 + $0x40] sm:$0xff]
  %v30 = vld [vmem:[%s1 + $0x48] sm:$0xff]
  %v31 = vld [vmem:[%s1 + $0x50] sm:$0xff]
  %v32 = vld [vmem:[%s1 + $0x58] sm:$0xff]
  %v33 = vld [vmem:[%s1 + $0x60] sm:$0xff]
  %v34 = vld [vmem:[%s1 + $0x68] sm:$0xff]
  %v35 = vld [vmem:[%s1 + $0x70] sm:$0xff]
  %v36 = vld [vmem:[%s1 + $0x78] sm:$0xff]
  %v38 = vlaneseq
  %v39 = vshrl.u32 %v38, 7
  %v40 = vsub.s32 0, %v39
  %v41 = vrot.slane %v19, %v40
  %43 = vmatprep.subr.mxu0 0.0
  %44 = vmatpush1.msra.mxu0 %v36
  %45 = vmatprep.subr.mxu0 0.0
  %46 = vmatpush1.msra.mxu0 %v35
  %47 = vmatprep.subr.mxu0 0.0
  %48 = vmatpush1.msra.mxu0 %v34
  %49 = vmatprep.subr.mxu0 0.0
  %50 = vmatpush1.msra.mxu0 %v33
  %51 = vmatprep.subr.mxu0 0.0
  %52 = vmatpush1.msra.mxu0 %v32
  %53 = vmatprep.subr.mxu0 0.0
  %54 = vmatpush1.msra.mxu0 %v31
  %55 = vmatprep.subr.mxu0 0.0
  %56 = vmatpush1.msra.mxu0 %v30
  %57 = vmatprep.subr.mxu0 0.0
  %58 = vmatpush1.msra.mxu0 %v29
  %59 = vmatprep.subr.mxu0 0.0
  %60 = vmatpush1.msra.mxu0 %v28
  %61 = vmatprep.subr.mxu0 0.0
  %62 = vmatpush1.msra.mxu0 %v27
  %63 = vmatprep.subr.mxu0 0.0
  %64 = vmatpush1.msra.mxu0 %v26
  %65 = vmatprep.subr.mxu0 0.0
  %66 = vmatpush1.msra.mxu0 %v25
  %67 = vmatprep.subr.mxu0 0.0
  %68 = vmatpush1.msra.mxu0 %v24
  %69 = vmatprep.subr.mxu0 0.0
  %70 = vmatpush1.msra.mxu0 %v23
  %71 = vmatprep.subr.mxu0 0.0
  %72 = vmatpush1.msra.mxu0 %v22
  %73 = vmatprep.subr.mxu0 0.0
  %74 = vmatpush1.msra.mxu0 %v21
  %75 = vmatprep.subr.mxu0 0.0
  %76 = vmatpush2.msra.mxu0 0.0
  %77 = vmatprep.subr.mxu0 0.0
  %78 = vmatpush2.msra.mxu0 0.0
  %79 = vmatprep.subr.mxu0 0.0
  %80 = vmatpush2.msra.mxu0 0.0
  %81 = vmatprep.subr.mxu0 0.0
  %82 = vmatpush2.msra.mxu0 0.0
  %83 = vmatprep.subr.mxu0 0.0
  %84 = vmatpush2.msra.mxu0 0.0
  %85 = vmatprep.subr.mxu0 0.0
  %86 = vmatpush2.msra.mxu0 0.0
  %87 = vmatprep.subr.mxu0 0.0
  %88 = vmatpush2.msra.mxu0 0.0
  %89 = vmatprep.subr.mxu0 0.0
  %90 = vmatpush2.msra.mxu0 0.0
  %91 = vmatprep.subr.mxu0 0.0
  %92 = vmatpush2.msra.mxu0 0.0
  %93 = vmatprep.subr.mxu0 0.0
  %94 = vmatpush2.msra.mxu0 0.0
  %95 = vmatprep.subr.mxu0 0.0
  %96 = vmatpush2.msra.mxu0 0.0
  %97 = vmatprep.subr.mxu0 0.0
  %98 = vmatpush2.msra.mxu0 0.0
  %99 = vmatprep.subr.mxu0 0.0
  %100 = vmatpush2.msra.mxu0 0.0
  %101 = vmatprep.subr.mxu0 0.0
  %102 = vmatpush2.msra.mxu0 0.0
  %103 = vmatprep.subr.mxu0 0.0
  %104 = vmatpush2.msra.mxu0 0.0
  %105 = vmatprep.subr.mxu0 0.0
  %106 = vmatpush2.msra.mxu0 0.0
  %107 = vmatprep.mubr.f32.mxu0 0.0
  %108 = vmatmul.mubr.f32.gmra.mxu0 %v17
  %v109 = vpop.f32.mrf.mxu0
  %v110 = vadd.f32 %v41, %v109
  %v111 = vpop.f32.mrf.mxu0
  %112 = vdwg.mxu0
  %v113 = vmax.f32 %v110, 0.0
  %v114 = vld [vmem:[%s2] sm:$0xff]
  %v115 = vld [vmem:[%s2 + $0x8] sm:$0xff]
  %v116 = vld [vmem:[%s2 + $0x10] sm:$0xff]
  %v117 = vld [vmem:[%s2 + $0x18] sm:$0xff]
  %v118 = vld [vmem:[%s2 + $0x20] sm:$0xff]
  %v119 = vld [vmem:[%s2 + $0x28] sm:$0xff]
  %v120 = vld [vmem:[%s2 + $0x30] sm:$0xff]
  %v121 = vld [vmem:[%s2 + $0x38] sm:$0xff]
  %v123 = vlaneseq
  %v124 = vshrl.u32 %v123, 7
  %v125 = vsub.s32 0, %v124
  %v126 = vrot.slane %v20, %v125
  %v127 = vlaneseq
  %v128 = vshrl.u32 %v127, 7
  %v129 = vsub.s32 1, %v128
  %v130 = vrot.slane %v20, %v129
  %vm133 = vcmask 261120
  %v135 = vsel %vm133, %v113, 0
  %137 = vmatprep.subr.mxu0 0.0
  %138 = vmatpush1.msra.mxu0 0.0
  %139 = vmatprep.subr.mxu0 0.0
  %140 = vmatpush1.msra.mxu0 0.0
  %141 = vmatprep.subr.mxu0 0.0
  %142 = vmatpush1.msra.mxu0 0.0
  %143 = vmatprep.subr.mxu0 0.0
  %144 = vmatpush1.msra.mxu0 0.0
  %145 = vmatprep.subr.mxu0 0.0
  %146 = vmatpush1.msra.mxu0 0.0
  %147 = vmatprep.subr.mxu0 0.0
  %148 = vmatpush1.msra.mxu0 0.0
  %149 = vmatprep.subr.mxu0 0.0
  %150 = vmatpush1.msra.mxu0 0.0
  %151 = vmatprep.subr.mxu0 0.0
  %152 = vmatpush1.msra.mxu0 0.0
  %153 = vmatprep.subr.mxu0 0.0
  %154 = vmatpush1.msra.mxu0 0.0
  %155 = vmatprep.subr.mxu0 0.0
  %156 = vmatpush1.msra.mxu0 0.0
  %157 = vmatprep.subr.mxu0 0.0
  %158 = vmatpush1.msra.mxu0 0.0
  %159 = vmatprep.subr.mxu0 0.0
  %160 = vmatpush1.msra.mxu0 0.0
  %161 = vmatprep.subr.mxu0 %v121
  %162 = vmatpush1.msra.mxu0 %v120
  %163 = vmatprep.subr.mxu0 %v119
  %164 = vmatpush1.msra.mxu0 %v118
  %165 = vmatprep.subr.mxu0 %v117
  %166 = vmatpush1.msra.mxu0 %v116
  %167 = vmatprep.subr.mxu0 %v115
  %168 = vmatpush1.msra.mxu0 %v114
  %169 = vmatprep.subr.mxu0 0.0
  %170 = vmatpush2.msra.mxu0 0.0
  %171 = vmatprep.subr.mxu0 0.0
  %172 = vmatpush2.msra.mxu0 0.0
  %173 = vmatprep.subr.mxu0 0.0
  %174 = vmatpush2.msra.mxu0 0.0
  %175 = vmatprep.subr.mxu0 0.0
  %176 = vmatpush2.msra.mxu0 0.0
  %177 = vmatprep.subr.mxu0 0.0
  %178 = vmatpush2.msra.mxu0 0.0
  %179 = vmatprep.subr.mxu0 0.0
  %180 = vmatpush2.msra.mxu0 0.0
  %181 = vmatprep.subr.mxu0 0.0
  %182 = vmatpush2.msra.mxu0 0.0
  %183 = vmatprep.subr.mxu0 0.0
  %184 = vmatpush2.msra.mxu0 0.0
  %185 = vmatprep.subr.mxu0 0.0
  %186 = vmatpush2.msra.mxu0 0.0
  %187 = vmatprep.subr.mxu0 0.0
  %188 = vmatpush2.msra.mxu0 0.0
  %189 = vmatprep.subr.mxu0 0.0
  %190 = vmatpush2.msra.mxu0 0.0
  %191 = vmatprep.subr.mxu0 0.0
  %192 = vmatpush2.msra.mxu0 0.0
  %193 = vmatprep.subr.mxu0 0.0
  %194 = vmatpush2.msra.mxu0 0.0
  %195 = vmatprep.subr.mxu0 0.0
  %196 = vmatpush2.msra.mxu0 0.0
  %197 = vmatprep.subr.mxu0 0.0
  %198 = vmatpush2.msra.mxu0 0.0
  %199 = vmatprep.subr.mxu0 0.0
  %200 = vmatpush2.msra.mxu0 0.0
  %201 = vmatprep.mubr.f32.mxu0 0.0
  %202 = vmatmul.mubr.f32.gmra.mxu0 %v135
  %v203 = vpop.f32.mrf.mxu0
  %v204 = vadd.f32 %v126, %v203
  %v205 = vpop.f32.mrf.mxu0
  %v206 = vadd.f32 %v130, %v205
  %207 = vdwg.mxu0
  %v208 = vmax.f32 %v206, 0.0
  %v209 = vand.u32 2147483647, %v206
  %v210 = vsub.f32 0.0, %v209
  %v211 = vmul.f32 %v210, 1.442695
  %v212 = vpow.pop %v211
  %v213 = vadd.f32 %v212, 1.0
  %v214 = vlog2.pop %v213
  %v215 = vmul.f32 %v214, 0.6931472
  %v216 = vmul.f32 -0.5, %v212
  %v217 = vadd.f32 %v216, 1.0
  %v218 = vmul.f32 %v217, %v212
  %v219 = vand.u32 2147483647, %v212
  %vm220 = vcmp.lt.f32.partialorder %v219, 0.0004427343
  %v221 = vsel %vm220, %v218, %v215
  %v222 = vadd.f32 %v208, %v221
  %v223 = vmul.f32 %v222, %v18
  %v224 = vadd.f32 %v204, %v223
  %v225 = vmul.f32 %v18, %v18
  %v226 = vmul.f32 %v225, -0.5
  %v227 = vlog2.pop %v222
  %v228 = vmul.f32 %v227, 0.6931472
  %v229 = vsub.f32 %v226, %v228
  %v230 = vsub.f32 %v229, 0.9189385
  %v231 = vtanh.pop %v224
  %v232 = vtanh.pop %v231
  %v233 = vmul.f32 %v232, %v232
  %v234 = vsub.f32 1.0, %v233
  %v235 = vadd.f32 %v234, 1e-07
  %v236 = vlog2.pop %v235
  %v237 = vmul.f32 %v236, 0.6931472
  %v238 = vsub.f32 %v230, %v237
  %v239 = vmul.f32 %v231, 2.0
  %240 = vst [vmem:[%s4] sm:$0xff] %v239
  %241 = vst [vmem:[%s4 + $0x8] sm:$0xff] %v238
  // Predicated region
  $region18: #{_lambda_.1} parent=0 // pred_check
    _
  $region19: #{_lambda_.1} parent=0 // pred_check_branch
    %243 = sbr.rel (0) target = $region21
  $region20: #{_lambda_.1} parent=0 // pred_region
    _
  $region21: #{_lambda_.1} parent=0 // pred_fallthru
    _
  // Predicated region
  $region22: #{_lambda_.1} parent=0 // pred_check
    _
  $region23: #{_lambda_.1} parent=0 // pred_check_branch
    %245 = sbr.rel (0) target = $region25
  $region24: #{_lambda_.1} parent=0 // pred_region
    _
  $region25: #{_lambda_.1} parent=0 // pred_fallthru
    _

</llo_original>
